<compile_context>
chip_gen: v6e
topology: v6e:2x2x1
jax: 0.10.0
libtpu: 0.0.40
codegen_flags: <defaults>
</compile_context>

<pallas_src>
import jax
import jax.numpy as jnp
from jax.experimental import pallas as pl
from jax.experimental.pallas import tpu as pltpu

_MIB = 1024 * 1024


def _copy_kernel(x_ref, o_ref):
    # Identity copy of the current tile (the only "compute" of a view).
    o_ref[...] = x_ref[...]


def _resolve_shape(target_shape, numel):
    """Resolve a single -1 entry, exactly like torch.Tensor.view."""
    shape = list(target_shape)
    neg = [i for i, s in enumerate(shape) if s == -1]
    if len(neg) > 1:
        raise ValueError("only one dimension can be inferred (-1)")
    if neg:
        known = 1
        for i, s in enumerate(shape):
            if i != neg[0]:
                known *= s
        if known == 0 or numel % known != 0:
            raise ValueError(f"shape {target_shape} is invalid for input of size {numel}")
        shape[neg[0]] = numel // known
    prod = 1
    for s in shape:
        prod *= s
    if prod != numel:
        raise ValueError(f"shape {target_shape} is invalid for input of size {numel}")
    return tuple(shape)


def _sublane_quantum(dtype):
    # Packed-dtype sublane quantum: f32 -> 8, bf16/f16 -> 16, int8/fp8 -> 32.
    return {1: 32, 2: 16, 4: 8}.get(jnp.dtype(dtype).itemsize, 8)


def _round_up(n, m):
    return ((n + m - 1) // m) * m


def _chip_params():
    """Per-generation (tile_bytes, vmem_limit_bytes, tensorcores_per_chip)."""
    kind = ""
    try:
        kind = jax.devices()[0].device_kind.lower()
    except Exception:
        pass
    if ("v7" in kind) or ("7x" in kind):
        # v7x: 64 MiB physical / 32 MiB scoped VMEM per TC; 2 TCs -> want grid >= 2.
        return 2 * _MIB, 32 * _MIB, 2
    if ("v5" in kind) or ("v6" in kind):
        # v5e/v6e: 128 MiB physical VMEM, 1 TC -> bigger blocks, explicit vmem limit.
        return 8 * _MIB, 64 * _MIB, 1
    # Unknown chip: conservative (v7x-safe) settings.
    return 2 * _MIB, 32 * _MIB, 2


def pallas_view(x, target_shape, *, use_pallas=True):
    """Equivalent of `View(target_shape)(x)`; copy done in Pallas when use_pallas."""
    numel = x.size
    out_shape = _resolve_shape(target_shape, numel)

    # Fast path (per review): a view is metadata-only — skip the kernel entirely.
    if not use_pallas or numel == 0 or x.ndim == 0:
        return x.reshape(out_shape)

    dtype = x.dtype
    itemsize = jnp.dtype(dtype).itemsize
    tile_bytes, vmem_limit, cores = _chip_params()
    flat = x.reshape(-1)

    cost = pl.CostEstimate(flops=0, transcendentals=0,
                           bytes_accessed=2 * numel * itemsize)
    cparams = pltpu.CompilerParams(
        dimension_semantics=("parallel",),   # independent tiles -> megacore sharding
        vmem_limit_bytes=vmem_limit,
    )

    if numel % 128 == 0:
        # ---- Lane-dense 2-D slab; no pad / no slice on this path. ----------
        C = 128
        for cand in (1024, 512, 256, 128):
            if numel % cand == 0:
                C = cand
                break
        R = numel // C
        slab = flat.reshape(R, C)

        sublane = _sublane_quantum(dtype)
        tile_rows = max(sublane,
                        (tile_bytes // (C * itemsize)) // sublane * sublane)
        TR = min(tile_rows, R)
        # Keep >= 2 grid steps when it costs nothing, so both v7x TensorCores
        # get work; irrelevant (and skipped) on single-TC chips.
        if cores >= 2 and TR >= R and R > sublane:
            TR = min(TR, _round_up(pl.cdiv(R, 2), sublane))
        grid_r = pl.cdiv(R, TR)

        copied = pl.pallas_call(
            _copy_kernel,
            out_shape=jax.ShapeDtypeStruct((R, C), dtype),
            grid_spec=pltpu.PrefetchScalarGridSpec(
                num_scalar_prefetch=0,
                grid=(grid_r,),
                in_specs=[pl.BlockSpec((TR, C), lambda i: (i, 0))],
                out_specs=pl.BlockSpec((TR, C), lambda i: (i, 0)),
            ),
            compiler_params=cparams,
            # In/out have identical shape+dtype: allow in-place copy.
            input_output_aliases={0: 0},
            cost_estimate=cost,
        )(slab)
        return copied.reshape(out_shape)

    # ---- Unaligned numel (not a multiple of 128). --------------------------
    # Copy the flat array directly; the (possibly partial) edge block is masked
    # by Pallas, so there is no jnp.pad / slice round trip (the old path cost
    # ~3x the HBM traffic).
    blk = max(1024, (tile_bytes // itemsize) // 1024 * 1024)
    blk = min(blk, numel)                       # full extent when the array is small
    grid = pl.cdiv(numel, blk)

    copied = pl.pallas_call(
        _copy_kernel,
        out_shape=jax.ShapeDtypeStruct((numel,), dtype),
        grid_spec=pltpu.PrefetchScalarGridSpec(
            num_scalar_prefetch=0,
            grid=(grid,),
            in_specs=[pl.BlockSpec((blk,), lambda i: (i,))],
            out_specs=pl.BlockSpec((blk,), lambda i: (i,)),
        ),
        compiler_params=cparams,
        input_output_aliases={0: 0},
        cost_estimate=cost,
    )(flat)
    return copied.reshape(out_shape)


class View:
    """Pallas-backed equivalent of the PyTorch `View` module."""

    def __init__(self, shape, use_pallas=True):
        self.shape = tuple(shape)
        self.use_pallas = use_pallas

    def __call__(self, x):
        return pallas_view(x, self.shape, use_pallas=self.use_pallas)


if __name__ == "__main__":
    key = jax.random.PRNGKey(0)
    k1, k2, k3, k4 = jax.random.split(key, 4)

    # Typical VAE usage: flatten conv features (N, C, H, W) -> (N, C*H*W).
    x = jax.random.normal(k1, (2, 4, 16, 16), dtype=jnp.float32)
    ref = x.reshape(2, 1024)

    # Metadata-only fast path (reviewer-suggested): no Pallas call at all.
    out_fast = jax.block_until_ready(View((-1, 4 * 16 * 16), use_pallas=False)(x))
    assert out_fast.shape == (2, 1024)
    assert bool(jnp.array_equal(out_fast, ref))

    # Pallas copy path (aligned, small: single lane-dense block).
    out = jax.block_until_ready(View((-1, 4 * 16 * 16))(x))
    assert out.shape == (2, 1024) and out.dtype == x.dtype
    assert bool(jnp.array_equal(out, ref))

    # Larger aligned input: multi-block grid (exercises tiling + megacore split).
    x1 = jax.random.normal(k2, (4, 32, 32, 32), dtype=jnp.float32)
    ref1 = x1.reshape(4, -1)
    out1 = jax.block_until_ready(View((4, -1))(x1))
    assert out1.shape == (4, 32 * 32 * 32)
    assert bool(jnp.array_equal(out1, ref1))

    # bf16 exercises the 16-row sublane quantum.
    xb = jax.random.normal(k3, (2, 4, 16, 16), dtype=jnp.bfloat16)
    refb = xb.reshape(2, -1)
    outb = jax.block_until_ready(View((2, -1))(xb))
    assert outb.shape == (2, 1024) and outb.dtype == jnp.bfloat16
    assert bool(jnp.array_equal(outb, refb))

    # Non-128-aligned numel exercises the pad-free remainder path.
    x2 = jax.random.normal(k4, (3, 5, 7), dtype=jnp.float32)
    ref2 = x2.reshape(7, 15)
    out2 = jax.block_until_ready(View((7, -1))(x2))
    assert out2.shape == (7, 15)
    assert bool(jnp.array_equal(out2, ref2))

    print("KERNEL_OK")
</pallas_src>

<mosaic_0001>
module attributes {stable_mosaic.version = 11 : i64} {
  func.func @_copy_kernel(%arg0: i32, %arg1: memref<2x1024xf32, #tpu.memory_space<vmem>>, %arg2: memref<2x1024xf32, #tpu.memory_space<vmem>>) attributes {dimension_semantics = [#tpu.dimension_semantics<parallel>], iteration_bounds = array<i64: 1>, scalar_prefetch = 0 : i64, scratch_operands = 0 : i64, tpu.core_type = #tpu.core_type<tc>, window_params = [{transform_indices = @transform_0, window_bounds = array<i64: 2, 1024>}, {transform_indices = @transform_1, window_bounds = array<i64: 2, 1024>}]} {
    %c0 = arith.constant 0 : index
    %c0_0 = arith.constant 0 : index
    %0 = vector.load %arg1[%c0, %c0_0] : memref<2x1024xf32, #tpu.memory_space<vmem>>, vector<2x1024xf32>
    %c0_1 = arith.constant 0 : index
    %c0_2 = arith.constant 0 : index
    %1 = vector.load %arg2[%c0_1, %c0_2] : memref<2x1024xf32, #tpu.memory_space<vmem>>, vector<2x1024xf32>
    tpu.vector_store %arg2[%c0_1, %c0_2], %0 {strides = array<i32>} : memref<2x1024xf32, #tpu.memory_space<vmem>>, vector<2x1024xf32>,
    return
  }
  func.func @transform_0(%arg0: i32) -> (i32, i32) {
    %c0_i32 = arith.constant 0 : i32
    %c0_i32_0 = arith.constant 0 : i32
    return %arg0, %c0_i32 : i32, i32
  }
  func.func @transform_1(%arg0: i32) -> (i32, i32) {
    %c0_i32 = arith.constant 0 : i32
    %c0_i32_0 = arith.constant 0 : i32
    return %arg0, %c0_i32 : i32, i32
  }
}

</mosaic_0001>

<llo_original>
// kernel: tpu_custom_call.1
$region0: #{tpu_custom_call.1}
  #allocation0 [shape = 'u32[]', space=smem, size = 0x4, offset = 0x4, fixed_abs, tag = 'smem constant byte address 0x4 - core index']
  #allocation1 [shape = 'u32[144,128]{1,0:T(1,128)}', space=vmem, size = 0x12000, scoped, tag = 'internal scratch']
  %s0 = inlined_call_operand.hbm [shape: f32[2,1024], index: 0, kind: input, shape index: {}, may-alias: {0,1}]
  %s1 = inlined_call_operand.hbm [shape: f32[2,1024], index: 1, kind: output, shape index: {}, may-alias: {0,1}]
  %s2 = sld [smem:[#allocation0]]
  $region18: #{tpu_custom_call.1} parent=0
    _
  %s4 = ssub.s32 1, %s2
  %s5 = scalar_select 0, %s4, %s2
  $region1: #{tpu_custom_call.1} parent=0
    #allocation2 [shape = 'u8[8192]{0}', space=vmem, size = 0x2000, scoped, tag = 'input window, operand 0, single buffered']
    #allocation3 [shape = 's32[1]{0}', space=sflag, size = 0x4, scoped, tag = 'scoped memory for tpu_custom_call.1']
    #allocation4 [shape = 's32[1]{0}', space=sflag, size = 0x4, scoped, tag = 'scoped memory for tpu_custom_call.1']
    #allocation5 [shape = 'u8[8192]{0}', space=vmem, size = 0x2000, scoped, tag = 'output window, operand 0, single buffered']
    %6 = vsyncpa [#allocation3], 0
    %7 = vsyncpa [#allocation4], 0
    // Predicated region
    $region2: #{tpu_custom_call.1} parent=1 // pred_check
      _
    $region3: #{tpu_custom_call.1} parent=1 // pred_check_branch
      %9 = sbr.rel (0) target = $region5
    $region4: #{tpu_custom_call.1} parent=1 // pred_region
      %s11 = ssub.s32 256, 256
      %12 = vsyncadd [#allocation3], %s11
      %s14 = sshll.u32 [#allocation2], 4
      %s15 = int_to_ptr.vmem [resolvable:$true] %s14
      %17 = dma.hbm_to_vmem [thread:$0]  %s0, 256, %s15, [#allocation3]
    $region5: #{tpu_custom_call.1} parent=1 // pred_fallthru
      _
    // Predicated region
    $region6: #{tpu_custom_call.1} parent=1 // pred_check
      _
    $region7: #{tpu_custom_call.1} parent=1 // pred_check_branch
      %19 = sbr.rel (0) target = $region9
    $region8: #{tpu_custom_call.1} parent=1 // pred_region
      %20 = dma.done [#allocation3], 256
    $region9: #{tpu_custom_call.1} parent=1 // pred_fallthru
      _
    %v21 = vld [vmem:[#allocation2] sm:$0xff]
    %v22 = vld [vmem:[#allocation2 + $0x8] sm:$0xff]
    %23 = vst [vmem:[#allocation5] sm:$0xff] %v21
    %24 = vst [vmem:[#allocation5 + $0x8] sm:$0xff] %v22
    // Predicated region
    $region10: #{tpu_custom_call.1} parent=1 // pred_check
      _
    $region11: #{tpu_custom_call.1} parent=1 // pred_check_branch
      %26 = sbr.rel (0) target = $region13
    $region12: #{tpu_custom_call.1} parent=1 // pred_region
      %s28 = ssub.s32 256, 256
      %29 = vsyncadd [#allocation4], %s28
      %s31 = sshll.u32 [#allocation5], 4
      %s32 = int_to_ptr.vmem [resolvable:$true] %s31
      %34 = dma.vmem_to_hbm [thread:$0]  %s32, 256, %s1, [#allocation4]
    $region13: #{tpu_custom_call.1} parent=1 // pred_fallthru
      _
    // Predicated region
    $region14: #{tpu_custom_call.1} parent=1 // pred_check
      _
    $region15: #{tpu_custom_call.1} parent=1 // pred_check_branch
      %36 = sbr.rel (0) target = $region17
    $region16: #{tpu_custom_call.1} parent=1 // pred_region
      %37 = dma.done [#allocation4], 256
    $region17: #{tpu_custom_call.1} parent=1 // pred_fallthru
      _
    %38 = vsyncpa [#allocation3], 1
    %39 = vsyncpa [#allocation4], 1

</llo_original>
